<compile_context>
chip_gen: v7x
topology: tpu7x:2x2x1
jax: 0.10.0
libtpu: 0.0.40
codegen_flags: <defaults>
</compile_context>

<pallas_src>
import jax
import jax.numpy as jnp
from jax.experimental import pallas as pl
from jax.experimental.pallas import tpu as pltpu

# Logical model dimensions (3 MDOF: 3 positions + 3 velocities -> 3 channels).
D_IN = 6
HIDDEN = 32
D_OUT = 3

# Lane-padded dimensions (TPU vreg lane width = 128).
H_PAD = 128      # HIDDEN padded to one full lane group
OUT_PAD = 128    # D_OUT padded so the output store is unmasked / lane-dense

# Max rows per batch tile.
TM_MAX = 512


def _round_up(n, m):
    return ((n + m - 1) // m) * m


# -----------------------------------------------------------------------------
# Pallas kernel: fused 2-layer MLP on one batch tile
# -----------------------------------------------------------------------------
def _mlp_kernel(x_ref, w1_ref, b1_ref, w2_ref, b2_ref, y_ref):
    # x tile: (tm, D_IN) f32.  MXU operands in bf16, accumulate in f32.
    x_bf = x_ref[...].astype(jnp.bfloat16)
    h = jnp.dot(x_bf, w1_ref[...], preferred_element_type=jnp.float32)
    h = jnp.tanh(h + b1_ref[...])                       # f32 VPU + EUP path
    y = jnp.dot(h.astype(jnp.bfloat16), w2_ref[...],
                preferred_element_type=jnp.float32)
    # (tm, OUT_PAD) lane-dense store (no masked vst.msk).
    y_ref[...] = (y + b2_ref[...]).astype(y_ref.dtype)


def base_model_forward(x, params):
    """Batch-tiled fused MLP via one pallas_call; returns (B, D_OUT) f32."""
    w1p, b1p, w2p, b2p = params
    b = x.shape[0]
    # Tile size: multiple of 8 sublanes, at most TM_MAX; pad batch to a multiple.
    tm = min(TM_MAX, _round_up(b, 8))
    b_pad = _round_up(b, tm)
    if b_pad != b:
        x = jnp.pad(x, ((0, b_pad - b), (0, 0)))
    grid = (b_pad // tm,)

    y_pad = pl.pallas_call(
        _mlp_kernel,
        out_shape=jax.ShapeDtypeStruct((b_pad, OUT_PAD), jnp.float32),
        grid=grid,
        in_specs=[
            pl.BlockSpec((tm, D_IN), lambda i: (i, 0)),       # streamed batch tile
            pl.BlockSpec((D_IN, H_PAD), lambda i: (0, 0)),    # resident weights
            pl.BlockSpec((1, H_PAD), lambda i: (0, 0)),
            pl.BlockSpec((H_PAD, OUT_PAD), lambda i: (0, 0)),
            pl.BlockSpec((1, OUT_PAD), lambda i: (0, 0)),
        ],
        out_specs=pl.BlockSpec((tm, OUT_PAD), lambda i: (i, 0)),
        compiler_params=pltpu.CompilerParams(
            dimension_semantics=("parallel",),  # v7x: batch tiles split over 2 TCs
        ),
    )(x, w1p, b1p, w2p, b2p)

    # Un-pad once, outside the kernel (single cheap XLA slice).
    return y_pad[:b, :D_OUT]


def ecnn_forward(x, params, baseline=False):
    """ECNN.forward: y = base_model(x); return y if baseline else y.split(1, 1)."""
    y = base_model_forward(x, params)
    if baseline:
        return y
    # torch.Tensor.split(1, 1): tuple of size-1 column slices along dim 1.
    return tuple(y[:, i:i + 1] for i in range(y.shape[1]))


def ecnn_time_derivative(x, params, t=None):
    # ECNN.time_derivative returns base_model(x) in both modes.
    return base_model_forward(x, params)


# -----------------------------------------------------------------------------
# Deterministic parameter init (PyTorch-Linear-style uniform), lane-padded
# -----------------------------------------------------------------------------
def init_params(key):
    k1, k2, k3, k4 = jax.random.split(key, 4)
    lim1 = 1.0 / jnp.sqrt(jnp.float32(D_IN))
    lim2 = 1.0 / jnp.sqrt(jnp.float32(HIDDEN))
    w1 = jax.random.uniform(k1, (D_IN, HIDDEN), jnp.float32, -lim1, lim1)
    b1 = jax.random.uniform(k2, (1, HIDDEN), jnp.float32, -lim1, lim1)
    w2 = jax.random.uniform(k3, (HIDDEN, D_OUT), jnp.float32, -lim2, lim2)
    b2 = jax.random.uniform(k4, (1, D_OUT), jnp.float32, -lim2, lim2)

    # Zero-pad hidden / output feature dims to 128 lanes; padded hidden units
    # get zero weight+bias (tanh(0)=0) and zero W2 rows, so padding is exact.
    w1p = jnp.zeros((D_IN, H_PAD), jnp.float32).at[:, :HIDDEN].set(w1)
    b1p = jnp.zeros((1, H_PAD), jnp.float32).at[:, :HIDDEN].set(b1)
    w2p = jnp.zeros((H_PAD, OUT_PAD), jnp.float32).at[:HIDDEN, :D_OUT].set(w2)
    b2p = jnp.zeros((1, OUT_PAD), jnp.float32).at[:, :D_OUT].set(b2)
    # MXU operand dtype: bf16 (f32 accumulation happens in-kernel).
    return (w1p.astype(jnp.bfloat16), b1p, w2p.astype(jnp.bfloat16), b2p)


if __name__ == "__main__":
    key = jax.random.PRNGKey(0)
    kx, kp = jax.random.split(key)

    # Many independent 3-MDOF state vectors evaluated in ONE pallas_call
    # (amortizes launch overhead; exercises batch tiling + the padding path:
    #  batch=1000 -> tm=512, padded to 1024 rows, grid=(2,)).
    batch = 1000
    x = jax.random.normal(kx, (batch, D_IN), jnp.float32)
    params = init_params(kp)

    outs = ecnn_forward(x, params, baseline=False)
    outs = jax.block_until_ready(outs)

    # Reference in plain JAX with the same bf16-operand / f32-accumulate math.
    w1p, b1p, w2p, b2p = params
    h_ref = jnp.tanh(
        jnp.dot(x.astype(jnp.bfloat16), w1p, preferred_element_type=jnp.float32)
        + b1p)
    y_ref = (jnp.dot(h_ref.astype(jnp.bfloat16), w2p,
                     preferred_element_type=jnp.float32) + b2p)[:, :D_OUT]

    assert len(outs) == D_OUT
    for i, o in enumerate(outs):
        assert o.shape == (batch, 1)
        assert jnp.allclose(o, y_ref[:, i:i + 1], atol=5e-3, rtol=1e-3), i

    # time_derivative path (full (B, D_OUT) output).
    td = jax.block_until_ready(ecnn_time_derivative(x, params))
    assert td.shape == (batch, D_OUT)
    assert jnp.allclose(td, y_ref, atol=5e-3, rtol=1e-3)

    print("KERNEL_OK")
</pallas_src>

<mosaic_0001>
module attributes {stable_mosaic.version = 11 : i64} {
  func.func @_mlp_kernel(%arg0: i32, %arg1: memref<512x6xf32, #tpu.memory_space<vmem>>, %arg2: memref<6x128xbf16, #tpu.memory_space<vmem>>, %arg3: memref<1x128xf32, #tpu.memory_space<vmem>>, %arg4: memref<128x128xbf16, #tpu.memory_space<vmem>>, %arg5: memref<1x128xf32, #tpu.memory_space<vmem>>, %arg6: memref<512x128xf32, #tpu.memory_space<vmem>>) attributes {dimension_semantics = [#tpu.dimension_semantics<parallel>], iteration_bounds = array<i64: 2>, scalar_prefetch = 0 : i64, scratch_operands = 0 : i64, tpu.core_type = #tpu.core_type<tc>, window_params = [{transform_indices = @transform_0, window_bounds = array<i64: 512, 6>}, {pipeline_mode = #tpu.pipeline_mode<synchronous>, transform_indices = @transform_1, window_bounds = array<i64: 6, 128>}, {pipeline_mode = #tpu.pipeline_mode<synchronous>, transform_indices = @transform_2, window_bounds = array<i64: 1, 128>}, {pipeline_mode = #tpu.pipeline_mode<synchronous>, transform_indices = @transform_3, window_bounds = array<i64: 128, 128>}, {pipeline_mode = #tpu.pipeline_mode<synchronous>, transform_indices = @transform_4, window_bounds = array<i64: 1, 128>}, {transform_indices = @transform_5, window_bounds = array<i64: 512, 128>}]} {
    %c0 = arith.constant 0 : index
    %c0_0 = arith.constant 0 : index
    %0 = vector.load %arg1[%c0, %c0_0] : memref<512x6xf32, #tpu.memory_space<vmem>>, vector<512x6xf32>
    %1 = arith.truncf %0 : vector<512x6xf32> to vector<512x6xbf16>
    %c0_1 = arith.constant 0 : index
    %c0_2 = arith.constant 0 : index
    %2 = vector.load %arg2[%c0_1, %c0_2] : memref<6x128xbf16, #tpu.memory_space<vmem>>, vector<6x128xbf16>
    %cst = arith.constant dense<0.000000e+00> : vector<512x128xf32>
    %3 = tpu.matmul %1, %2, %cst {dimension_numbers = #tpu.dot_dimension_numbers<[1], [0], [0], [1], [0, 0, 1, 1], [], []>} : vector<512x6xbf16>, vector<6x128xbf16>, vector<512x128xf32> -> vector<512x128xf32>
    %c0_3 = arith.constant 0 : index
    %c0_4 = arith.constant 0 : index
    %4 = vector.load %arg3[%c0_3, %c0_4] : memref<1x128xf32, #tpu.memory_space<vmem>>, vector<1x128xf32>
    %5 = vector.broadcast %4 : vector<1x128xf32> to vector<512x128xf32>
    %6 = arith.addf %3, %5 : vector<512x128xf32>
    %7 = math.tanh %6 : vector<512x128xf32>
    %8 = arith.truncf %7 : vector<512x128xf32> to vector<512x128xbf16>
    %c0_5 = arith.constant 0 : index
    %c0_6 = arith.constant 0 : index
    %9 = vector.load %arg4[%c0_5, %c0_6] : memref<128x128xbf16, #tpu.memory_space<vmem>>, vector<128x128xbf16>
    %cst_7 = arith.constant dense<0.000000e+00> : vector<512x128xf32>
    %10 = tpu.matmul %8, %9, %cst_7 {dimension_numbers = #tpu.dot_dimension_numbers<[1], [0], [0], [1], [0, 0, 1, 1], [], []>} : vector<512x128xbf16>, vector<128x128xbf16>, vector<512x128xf32> -> vector<512x128xf32>
    %c0_8 = arith.constant 0 : index
    %c0_9 = arith.constant 0 : index
    %11 = vector.load %arg5[%c0_8, %c0_9] : memref<1x128xf32, #tpu.memory_space<vmem>>, vector<1x128xf32>
    %12 = vector.broadcast %11 : vector<1x128xf32> to vector<512x128xf32>
    %13 = arith.addf %10, %12 : vector<512x128xf32>
    %c0_10 = arith.constant 0 : index
    %c0_11 = arith.constant 0 : index
    %14 = vector.load %arg6[%c0_10, %c0_11] : memref<512x128xf32, #tpu.memory_space<vmem>>, vector<512x128xf32>
    tpu.vector_store %arg6[%c0_10, %c0_11], %13 {strides = array<i32>} : memref<512x128xf32, #tpu.memory_space<vmem>>, vector<512x128xf32>,
    return
  }
  func.func @transform_0(%arg0: i32) -> (i32, i32) {
    %c0_i32 = arith.constant 0 : i32
    %c0_i32_0 = arith.constant 0 : i32
    return %arg0, %c0_i32 : i32, i32
  }
  func.func @transform_1(%arg0: i32) -> (i32, i32) {
    %c0_i32 = arith.constant 0 : i32
    %c0_i32_0 = arith.constant 0 : i32
    %c0_i32_1 = arith.constant 0 : i32
    return %c0_i32, %c0_i32_0 : i32, i32
  }
  func.func @transform_2(%arg0: i32) -> (i32, i32) {
    %c0_i32 = arith.constant 0 : i32
    %c0_i32_0 = arith.constant 0 : i32
    %c0_i32_1 = arith.constant 0 : i32
    return %c0_i32, %c0_i32_0 : i32, i32
  }
  func.func @transform_3(%arg0: i32) -> (i32, i32) {
    %c0_i32 = arith.constant 0 : i32
    %c0_i32_0 = arith.constant 0 : i32
    %c0_i32_1 = arith.constant 0 : i32
    return %c0_i32, %c0_i32_0 : i32, i32
  }
  func.func @transform_4(%arg0: i32) -> (i32, i32) {
    %c0_i32 = arith.constant 0 : i32
    %c0_i32_0 = arith.constant 0 : i32
    %c0_i32_1 = arith.constant 0 : i32
    return %c0_i32, %c0_i32_0 : i32, i32
  }
  func.func @transform_5(%arg0: i32) -> (i32, i32) {
    %c0_i32 = arith.constant 0 : i32
    %c0_i32_0 = arith.constant 0 : i32
    return %arg0, %c0_i32 : i32, i32
  }
}

</mosaic_0001>

<llo_original>
// kernel: tpu_custom_call.1
$region0: #{tpu_custom_call.1}
  #allocation0 [shape = 'u32[]', space=smem, size = 0x4, offset = 0x4, fixed_abs, tag = 'smem constant byte address 0x4 - core index']
  #allocation1 [shape = 'u32[144,128]{1,0:T(1,128)}', space=vmem, size = 0x12000, scoped, tag = 'internal scratch']
  %s0 = inlined_call_operand.vmem [shape: f32[1024,6], index: 0, kind: input, shape index: {}]
  %s1 = inlined_call_operand.vmem [shape: bf16[6,128], index: 1, kind: input, shape index: {}]
  %s2 = inlined_call_operand.vmem [shape: f32[1,128], index: 2, kind: input, shape index: {}]
  %s3 = inlined_call_operand.vmem [shape: bf16[128,128], index: 3, kind: input, shape index: {}]
  %s4 = inlined_call_operand.vmem [shape: f32[1,128], index: 4, kind: input, shape index: {}]
  %s5 = inlined_call_operand.hbm [shape: f32[1024,128], index: 5, kind: output, shape index: {}]
  %s6 = sld [smem:[#allocation0]]
  $region53: #{tpu_custom_call.1} parent=0
    _
  %s8 = ssub.s32 1, %s6
  %s9 = scalar_select 0, %s8, %s6
  $region1: #{tpu_custom_call.1} parent=0
    #allocation2 [shape = 'u8[524288]{0}', space=vmem, size = 0x80000, scoped, tag = 'output window, operand 0']
    #allocation3 [shape = 's32[2]{0}', space=sflag, size = 0x8, scoped, tag = 'scoped memory for tpu_custom_call.1']
    %10 = vsyncpa [#allocation3], 0
    %s11 = scalar_lea.sflag [#allocation3], 1
    %12 = vsyncpa %s11, 0
    loop: start=0, step=1, limit=4
    $region2: #{tpu_custom_call.1} parent=1 // loop_pre_header
      _
    $region3: #{tpu_custom_call.1} parent=1 // loop_header
      %s14 = sphi 0, %s18
      %p15 = scmp.ge.s32.totalorder %s14, 4
      %s24 = sphi 0, %s26
      %s27 = sphi 0, %s24
      %s28 = sphi 0, %s27
      %s44 = sphi 0, %s28
      %s48 = sphi 0, %s48
      %s50 = sphi 0, %s48
      %s51 = sphi 0, %s50
      %s65 = sphi 0, %s51
      %s69 = sphi 0, %s69
      %s71 = sphi 0, %s69
      %s72 = sphi 0, %s71
      %s86 = sphi 0, %s72
      %s90 = sphi 0, %s90
      %s92 = sphi 0, %s90
      %s93 = sphi 0, %s92
      %s107 = sphi 0, %s93
      %s111 = sphi 0, %s111
      %s113 = sphi 0, %s111
      %s114 = sphi 0, %s113
      %s128 = sphi 0, %s114
      %s134 = sphi 0, %s136
      %s137 = sphi 0, %s134
      %s138 = sphi 0, %s137
      %s154 = sphi 0, %s138
    $region4: #{tpu_custom_call.1} parent=1 // loop_header_branch
      %17 = sbr.rel (%p15) target = $region8
    $region5: #{tpu_custom_call.1} parent=1 // loop_body
      %s19 = ssub.s32 %s14, 1
      %s20 = ssub.s32 %s14, 2
      %s21 = sadd.s32 %s14, 1
      %s22 = ssub.s32 %s14, %s21
      %p23 = scmp.eq.s32.totalorder %s22, 0
      %s25 = sadd.s32 %s24, 1
      %s26 = scalar_select %p23, %s24, %s25
      %p29 = pneg %p23
      %p30 = scmp.eq.s32.totalorder %s14, 1
      %p31 = por %p29, %p30
      %p32 = scmp.ne.s32.totalorder %s24, %s27
      %p33 = scmp.eq.s32.totalorder %s14, 0
      %p34 = por %p32, %p33
      %p35 = scmp.ne.s32.totalorder %s24, %s27
      %p36 = scmp.eq.s32.totalorder %s19, 1
      %p37 = por %p35, %p36
      %p38 = scmp.ne.s32.totalorder %s27, %s28
      %p39 = scmp.eq.s32.totalorder %s19, 0
      %p40 = por %p38, %p39
      %p41 = scmp.ne.s32.totalorder %s27, %s28
      %p42 = scmp.eq.s32.totalorder %s20, 1
      %p43 = por %p41, %p42
      %p45 = scmp.ne.s32.totalorder %s28, %s44
      %p46 = scmp.eq.s32.totalorder %s20, 0
      %p47 = por %p45, %p46
      %s49 = sadd.s32 %s48, 1
      %p52 = scmp.eq.s32.totalorder %s14, 1
      %p53 = scmp.ne.s32.totalorder %s48, %s50
      %p54 = scmp.eq.s32.totalorder %s14, 0
      %p55 = por %p53, %p54
      %p56 = scmp.ne.s32.totalorder %s48, %s50
      %p57 = scmp.eq.s32.totalorder %s19, 1
      %p58 = por %p56, %p57
      %p59 = scmp.ne.s32.totalorder %s50, %s51
      %p60 = scmp.eq.s32.totalorder %s19, 0
      %p61 = por %p59, %p60
      %p62 = scmp.ne.s32.totalorder %s50, %s51
      %p63 = scmp.eq.s32.totalorder %s20, 1
      %p64 = por %p62, %p63
      %p66 = scmp.ne.s32.totalorder %s51, %s65
      %p67 = scmp.eq.s32.totalorder %s20, 0
      %p68 = por %p66, %p67
      %s70 = sadd.s32 %s69, 1
      %p73 = scmp.eq.s32.totalorder %s14, 1
      %p74 = scmp.ne.s32.totalorder %s69, %s71
      %p75 = scmp.eq.s32.totalorder %s14, 0
      %p76 = por %p74, %p75
      %p77 = scmp.ne.s32.totalorder %s69, %s71
      %p78 = scmp.eq.s32.totalorder %s19, 1
      %p79 = por %p77, %p78
      %p80 = scmp.ne.s32.totalorder %s71, %s72
      %p81 = scmp.eq.s32.totalorder %s19, 0
      %p82 = por %p80, %p81
      %p83 = scmp.ne.s32.totalorder %s71, %s72
      %p84 = scmp.eq.s32.totalorder %s20, 1
      %p85 = por %p83, %p84
      %p87 = scmp.ne.s32.totalorder %s72, %s86
      %p88 = scmp.eq.s32.totalorder %s20, 0
      %p89 = por %p87, %p88
      %s91 = sadd.s32 %s90, 1
      %p94 = scmp.eq.s32.totalorder %s14, 1
      %p95 = scmp.ne.s32.totalorder %s90, %s92
      %p96 = scmp.eq.s32.totalorder %s14, 0
      %p97 = por %p95, %p96
      %p98 = scmp.ne.s32.totalorder %s90, %s92
      %p99 = scmp.eq.s32.totalorder %s19, 1
      %p100 = por %p98, %p99
      %p101 = scmp.ne.s32.totalorder %s92, %s93
      %p102 = scmp.eq.s32.totalorder %s19, 0
      %p103 = por %p101, %p102
      %p104 = scmp.ne.s32.totalorder %s92, %s93
      %p105 = scmp.eq.s32.totalorder %s20, 1
      %p106 = por %p104, %p105
      %p108 = scmp.ne.s32.totalorder %s93, %s107
      %p109 = scmp.eq.s32.totalorder %s20, 0
      %p110 = por %p108, %p109
      %s112 = sadd.s32 %s111, 1
      %p115 = scmp.eq.s32.totalorder %s14, 1
      %p116 = scmp.ne.s32.totalorder %s111, %s113
      %p117 = scmp.eq.s32.totalorder %s14, 0
      %p118 = por %p116, %p117
      %p119 = scmp.ne.s32.totalorder %s111, %s113
      %p120 = scmp.eq.s32.totalorder %s19, 1
      %p121 = por %p119, %p120
      %p122 = scmp.ne.s32.totalorder %s113, %s114
      %p123 = scmp.eq.s32.totalorder %s19, 0
      %p124 = por %p122, %p123
      %p125 = scmp.ne.s32.totalorder %s113, %s114
      %p126 = scmp.eq.s32.totalorder %s20, 1
      %p127 = por %p125, %p126
      %p129 = scmp.ne.s32.totalorder %s114, %s128
      %p130 = scmp.eq.s32.totalorder %s20, 0
      %p131 = por %p129, %p130
      %s132 = ssub.s32 %s14, %s21
      %p133 = scmp.eq.s32.totalorder %s132, 0
      %s135 = sadd.s32 %s134, 1
      %s136 = scalar_select %p133, %s134, %s135
      %p139 = pneg %p133
      %p140 = scmp.eq.s32.totalorder %s14, 1
      %p141 = por %p139, %p140
      %p142 = scmp.ne.s32.totalorder %s134, %s137
      %p143 = scmp.eq.s32.totalorder %s14, 0
      %p144 = por %p142, %p143
      %p145 = scmp.ne.s32.totalorder %s134, %s137
      %p146 = scmp.eq.s32.totalorder %s19, 1
      %p147 = por %p145, %p146
      %p148 = scmp.ne.s32.totalorder %s137, %s138
      %p149 = scmp.eq.s32.totalorder %s19, 0
      %p150 = por %p148, %p149
      %p151 = scmp.ne.s32.totalorder %s137, %s138
      %p152 = scmp.eq.s32.totalorder %s20, 1
      %p153 = por %p151, %p152
      %p155 = scmp.ne.s32.totalorder %s138, %s154
      %p156 = scmp.eq.s32.totalorder %s20, 0
      %p157 = por %p155, %p156
      %p158 = scmp.le.s32.totalorder 1, %s14
      %p159 = scmp.lt.s32.totalorder %s14, 3
      %p160 = pnand %p158, %p159
      %p161 = pneg %p160
      // Predicated region
      $region9: #{tpu_custom_call.1} parent=5 // pred_check
        _
      $region10: #{tpu_custom_call.1} parent=5 // pred_check_branch
        %163 = sbr.rel (%p160) target = $region12
      $region11: #{tpu_custom_call.1} parent=5 // pred_region
        %s164 = ssub.s32 %s14, 1
        // Predicated region
        $region13: #{tpu_custom_call.1} parent=11 // pred_check
          %p165 = pneg %p61
        $region14: #{tpu_custom_call.1} parent=11 // pred_check_branch
          %167 = sbr.rel (%p165) target = $region16
        $region15: #{tpu_custom_call.1} parent=11 // pred_region
          _
        $region16: #{tpu_custom_call.1} parent=11 // pred_fallthru
          _
        // Predicated region
        $region17: #{tpu_custom_call.1} parent=11 // pred_check
          %p168 = pneg %p82
        $region18: #{tpu_custom_call.1} parent=11 // pred_check_branch
          %170 = sbr.rel (%p168) target = $region20
        $region19: #{tpu_custom_call.1} parent=11 // pred_region
          _
        $region20: #{tpu_custom_call.1} parent=11 // pred_fallthru
          _
        // Predicated region
        $region21: #{tpu_custom_call.1} parent=11 // pred_check
          %p171 = pneg %p103
        $region22: #{tpu_custom_call.1} parent=11 // pred_check_branch
          %173 = sbr.rel (%p171) target = $region24
        $region23: #{tpu_custom_call.1} parent=11 // pred_region
          _
        $region24: #{tpu_custom_call.1} parent=11 // pred_fallthru
          _
        // Predicated region
        $region25: #{tpu_custom_call.1} parent=11 // pred_check
          %p174 = pneg %p124
        $region26: #{tpu_custom_call.1} parent=11 // pred_check_branch
          %176 = sbr.rel (%p174) target = $region28
        $region27: #{tpu_custom_call.1} parent=11 // pred_region
          _
        $region28: #{tpu_custom_call.1} parent=11 // pred_fallthru
          _
      $region12: #{tpu_custom_call.1} parent=5 // pred_fallthru
        _
      %p177 = scmp.lt.s32.totalorder %s14, 2
      // Predicated region
      $region29: #{tpu_custom_call.1} parent=5 // pred_check
        %p178 = pneg %p177
      $region30: #{tpu_custom_call.1} parent=5 // pred_check_branch
        %180 = sbr.rel (%p178) target = $region32
      $region31: #{tpu_custom_call.1} parent=5 // pred_region
        // Predicated region
        $region33: #{tpu_custom_call.1} parent=31 // pred_check
          %p181 = pneg %p34
        $region34: #{tpu_custom_call.1} parent=31 // pred_check_branch
          %183 = sbr.rel (%p181) target = $region36
        $region35: #{tpu_custom_call.1} parent=31 // pred_region
          %s184 = smul.u32 64, %s14
          %p185 = scmp.lt.s32.totalorder %s184, 127
          %s186 = scalar_select %p185, %s184, 127
          %s187 = smul.addr %s186, 8
          %s188 = scalar_lea.vmem %s0, %s187
          %s189 = smul.u32 64, %s14
        $region36: #{tpu_custom_call.1} parent=31 // pred_fallthru
          _
      $region32: #{tpu_custom_call.1} parent=5 // pred_fallthru
        _
      %p190 = scmp.le.s32.totalorder 1, %s14
      %p191 = scmp.lt.s32.totalorder %s14, 3
      %p192 = pnand %p190, %p191
      %p193 = pneg %p192
      // Predicated region
      $region37: #{tpu_custom_call.1} parent=5 // pred_check
        _
      $region38: #{tpu_custom_call.1} parent=5 // pred_check_branch
        %195 = sbr.rel (%p192) target = $region40
      $region39: #{tpu_custom_call.1} parent=5 // pred_region
        %s196 = ssub.s32 %s14, 1
        %s197 = smul.u32 64, %s19
        %p198 = scmp.lt.s32.totalorder %s197, 127
        %s199 = scalar_select %p198, %s197, 127
        %s200 = smul.addr %s199, 8
        %s201 = scalar_lea.vmem %s0, %s200
        %p202 = pneg %p40
        %p203 = pneg %p37
        %p204 = pneg %p61
        %p205 = pneg %p58
        %p206 = pneg %p82
        %p207 = pneg %p79
        %p208 = pneg %p103
        %p209 = pneg %p100
        %p210 = pneg %p124
        %p211 = pneg %p121
        %p212 = pneg %p150
        %p213 = pneg %p147
        %s214 = sand.u32 %s137, 1
        %s215 = scalar_lea.sflag [#allocation3], %s214
        %s216 = sand.u32 %s137, 1
        %s217 = smul.addr %s216, 512
        %s218 = scalar_lea.vmem [#allocation2], %s217
        %s219 = smul.u32 64, %s19
        %p220 = scmp.lt.s32.totalorder %s219, 127
        %s221 = scalar_select %p220, %s219, 127
        %s222 = smul.addr %s221, 8
        %s223 = scalar_lea.vmem %s0, %s222
        %s224 = smul.u32 64, %s19
        %s225 = smul.u32 64, %s19
        %v227 = vld [vmem:[%s223] sm:$0xff]
        %v228 = vld [vmem:[%s223 + $0x8] sm:$0xff]
        %v229 = vld [vmem:[%s223 + $0x10] sm:$0xff]
        %v230 = vld [vmem:[%s223 + $0x18] sm:$0xff]
        %v231 = vld [vmem:[%s223 + $0x20] sm:$0xff]
        %v232 = vld [vmem:[%s223 + $0x28] sm:$0xff]
        %v233 = vld [vmem:[%s223 + $0x30] sm:$0xff]
        %v234 = vld [vmem:[%s223 + $0x38] sm:$0xff]
        %v235 = vld [vmem:[%s223 + $0x40] sm:$0xff]
        %v236 = vld [vmem:[%s223 + $0x48] sm:$0xff]
        %v237 = vld [vmem:[%s223 + $0x50] sm:$0xff]
        %v238 = vld [vmem:[%s223 + $0x58] sm:$0xff]
        %v239 = vld [vmem:[%s223 + $0x60] sm:$0xff]
        %v240 = vld [vmem:[%s223 + $0x68] sm:$0xff]
        %v241 = vld [vmem:[%s223 + $0x70] sm:$0xff]
        %v242 = vld [vmem:[%s223 + $0x78] sm:$0xff]
        %v243 = vld [vmem:[%s223 + $0x80] sm:$0xff]
        %v244 = vld [vmem:[%s223 + $0x88] sm:$0xff]
        %v245 = vld [vmem:[%s223 + $0x90] sm:$0xff]
        %v246 = vld [vmem:[%s223 + $0x98] sm:$0xff]
        %v247 = vld [vmem:[%s223 + $0xa0] sm:$0xff]
        %v248 = vld [vmem:[%s223 + $0xa8] sm:$0xff]
        %v249 = vld [vmem:[%s223 + $0xb0] sm:$0xff]
        %v250 = vld [vmem:[%s223 + $0xb8] sm:$0xff]
        %v251 = vld [vmem:[%s223 + $0xc0] sm:$0xff]
        %v252 = vld [vmem:[%s223 + $0xc8] sm:$0xff]
        %v253 = vld [vmem:[%s223 + $0xd0] sm:$0xff]
        %v254 = vld [vmem:[%s223 + $0xd8] sm:$0xff]
        %v255 = vld [vmem:[%s223 + $0xe0] sm:$0xff]
        %v256 = vld [vmem:[%s223 + $0xe8] sm:$0xff]
        %v257 = vld [vmem:[%s223 + $0xf0] sm:$0xff]
        %v258 = vld [vmem:[%s223 + $0xf8] sm:$0xff]
        %v259 = vld [vmem:[%s223 + $0x100] sm:$0xff]
        %v260 = vld [vmem:[%s223 + $0x108] sm:$0xff]
        %v261 = vld [vmem:[%s223 + $0x110] sm:$0xff]
        %v262 = vld [vmem:[%s223 + $0x118] sm:$0xff]
        %v263 = vld [vmem:[%s223 + $0x120] sm:$0xff]
        %v264 = vld [vmem:[%s223 + $0x128] sm:$0xff]
        %v265 = vld [vmem:[%s223 + $0x130] sm:$0xff]
        %v266 = vld [vmem:[%s223 + $0x138] sm:$0xff]
        %v267 = vld [vmem:[%s223 + $0x140] sm:$0xff]
        %v268 = vld [vmem:[%s223 + $0x148] sm:$0xff]
        %v269 = vld [vmem:[%s223 + $0x150] sm:$0xff]
        %v270 = vld [vmem:[%s223 + $0x158] sm:$0xff]
        %v271 = vld [vmem:[%s223 + $0x160] sm:$0xff]
        %v272 = vld [vmem:[%s223 + $0x168] sm:$0xff]
        %v273 = vld [vmem:[%s223 + $0x170] sm:$0xff]
        %v274 = vld [vmem:[%s223 + $0x178] sm:$0xff]
        %v275 = vld [vmem:[%s223 + $0x180] sm:$0xff]
        %v276 = vld [vmem:[%s223 + $0x188] sm:$0xff]
        %v277 = vld [vmem:[%s223 + $0x190] sm:$0xff]
        %v278 = vld [vmem:[%s223 + $0x198] sm:$0xff]
        %v279 = vld [vmem:[%s223 + $0x1a0] sm:$0xff]
        %v280 = vld [vmem:[%s223 + $0x1a8] sm:$0xff]
        %v281 = vld [vmem:[%s223 + $0x1b0] sm:$0xff]
        %v282 = vld [vmem:[%s223 + $0x1b8] sm:$0xff]
        %v283 = vld [vmem:[%s223 + $0x1c0] sm:$0xff]
        %v284 = vld [vmem:[%s223 + $0x1c8] sm:$0xff]
        %v285 = vld [vmem:[%s223 + $0x1d0] sm:$0xff]
        %v286 = vld [vmem:[%s223 + $0x1d8] sm:$0xff]
        %v287 = vld [vmem:[%s223 + $0x1e0] sm:$0xff]
        %v288 = vld [vmem:[%s223 + $0x1e8] sm:$0xff]
        %v289 = vld [vmem:[%s223 + $0x1f0] sm:$0xff]
        %v290 = vld [vmem:[%s223 + $0x1f8] sm:$0xff]
        %v291 = vpack.c.bf16 %v228, %v227
        %v292 = vpack.c.bf16 %v230, %v229
        %v293 = vpack.c.bf16 %v232, %v231
        %v294 = vpack.c.bf16 %v234, %v233
        %v295 = vpack.c.bf16 %v236, %v235
        %v296 = vpack.c.bf16 %v238, %v237
        %v297 = vpack.c.bf16 %v240, %v239
        %v298 = vpack.c.bf16 %v242, %v241
        %v299 = vpack.c.bf16 %v244, %v243
        %v300 = vpack.c.bf16 %v246, %v245
        %v301 = vpack.c.bf16 %v248, %v247
        %v302 = vpack.c.bf16 %v250, %v249
        %v303 = vpack.c.bf16 %v252, %v251
        %v304 = vpack.c.bf16 %v254, %v253
        %v305 = vpack.c.bf16 %v256, %v255
        %v306 = vpack.c.bf16 %v258, %v257
        %v307 = vpack.c.bf16 %v260, %v259
        %v308 = vpack.c.bf16 %v262, %v261
        %v309 = vpack.c.bf16 %v264, %v263
        %v310 = vpack.c.bf16 %v266, %v265
        %v311 = vpack.c.bf16 %v268, %v267
        %v312 = vpack.c.bf16 %v270, %v269
        %v313 = vpack.c.bf16 %v272, %v271
        %v314 = vpack.c.bf16 %v274, %v273
        %v315 = vpack.c.bf16 %v276, %v275
        %v316 = vpack.c.bf16 %v278, %v277
        %v317 = vpack.c.bf16 %v280, %v279
        %v318 = vpack.c.bf16 %v282, %v281
        %v319 = vpack.c.bf16 %v284, %v283
        %v320 = vpack.c.bf16 %v286, %v285
        %v321 = vpack.c.bf16 %v288, %v287
        %v322 = vpack.c.bf16 %v290, %v289
        %v323 = vld [vmem:[%s1] sm:$0x7]
        %v324 = vld [vmem:[%s2] sm:$0x1]
        %v326 = vlaneseq
        %v327 = vshrl.u32 %v326, 7
        %v328 = vsub.s32 0, %v327
        %v329 = vrot.slane %v324, %v328
        %vm331 = vcmask 48128
        %v333 = vsel %vm331, %v291, 0
        %v336 = vsel %vm331, %v292, 0
        %v339 = vsel %vm331, %v293, 0
        %v342 = vsel %vm331, %v294, 0
        %v345 = vsel %vm331, %v295, 0
        %v348 = vsel %vm331, %v296, 0
        %v351 = vsel %vm331, %v297, 0
        %v354 = vsel %vm331, %v298, 0
        %v357 = vsel %vm331, %v299, 0
        %v360 = vsel %vm331, %v300, 0
        %v363 = vsel %vm331, %v301, 0
        %v366 = vsel %vm331, %v302, 0
        %v369 = vsel %vm331, %v303, 0
        %v372 = vsel %vm331, %v304, 0
        %v375 = vsel %vm331, %v305, 0
        %v378 = vsel %vm331, %v306, 0
        %v381 = vsel %vm331, %v307, 0
        %v384 = vsel %vm331, %v308, 0
        %v387 = vsel %vm331, %v309, 0
        %v390 = vsel %vm331, %v310, 0
        %v393 = vsel %vm331, %v311, 0
        %v396 = vsel %vm331, %v312, 0
        %v399 = vsel %vm331, %v313, 0
        %v402 = vsel %vm331, %v314, 0
        %v405 = vsel %vm331, %v315, 0
        %v408 = vsel %vm331, %v316, 0
        %v411 = vsel %vm331, %v317, 0
        %v414 = vsel %vm331, %v318, 0
        %v417 = vsel %vm331, %v319, 0
        %v420 = vsel %vm331, %v320, 0
        %v423 = vsel %vm331, %v321, 0
        %v426 = vsel %vm331, %v322, 0
        %vm428 = vcmask 1042432
        %v430 = vsel %vm428, %v323, 0
        %432 = vmatprep.subr.bf16.mxu0 0
        %433 = vmatpush1.bf16.msra.mxu0 %v430
        %434 = vmatprep.subr.bf16.mxu0 0
        %435 = vmatpush1.bf16.msra.mxu0 0
        %436 = vmatprep.subr.bf16.mxu0 0
        %437 = vmatpush1.bf16.msra.mxu0 0
        %438 = vmatprep.subr.bf16.mxu0 0
        %439 = vmatpush1.bf16.msra.mxu0 0
        %440 = vmatprep.subr.bf16.mxu0 0
        %441 = vmatpush1.bf16.msra.mxu0 0
        %442 = vmatprep.subr.bf16.mxu0 0
        %443 = vmatpush1.bf16.msra.mxu0 0
        %444 = vmatprep.subr.bf16.mxu0 0
        %445 = vmatpush1.bf16.msra.mxu0 0
        %446 = vmatprep.subr.bf16.mxu0 0
        %447 = vmatpush1.bf16.msra.mxu0 0
        %448 = vmatprep.subr.bf16.mxu0 0
        %449 = vmatpush1.bf16.msra.mxu0 0
        %450 = vmatprep.subr.bf16.mxu0 0
        %451 = vmatpush1.bf16.msra.mxu0 0
        %452 = vmatprep.subr.bf16.mxu0 0
        %453 = vmatpush1.bf16.msra.mxu0 0
        %454 = vmatprep.subr.bf16.mxu0 0
        %455 = vmatpush1.bf16.msra.mxu0 0
        %456 = vmatprep.subr.bf16.mxu0 0
        %457 = vmatpush1.bf16.msra.mxu0 0
        %458 = vmatprep.subr.bf16.mxu0 0
        %459 = vmatpush1.bf16.msra.mxu0 0
        %460 = vmatprep.subr.bf16.mxu0 0
        %461 = vmatpush1.bf16.msra.mxu0 0
        %462 = vmatprep.subr.bf16.mxu0 0
        %463 = vmatpush1.bf16.msra.mxu0 0
        %464 = vmatprep.mubr.bf16.mxu0 0
        %465 = vmatmul.mubr.bf16.gmra.mrb[0].mxu0 %v333
        %v466 = vpop.f32.mrb[0].mxu0
        %v467 = vadd.f32 %v329, %v466
        %v468 = vpop.f32.mrb[0].mxu0
        %v469 = vpop.f32.mrb[0].mxu0
        %v470 = vadd.f32 %v329, %v469
        %v471 = vpop.f32.mrb[0].mxu0
        %472 = vmatprep.mubr.bf16.mxu0 0
        %473 = vmatmul.mubr.bf16.gmra.mrb[0].mxu0 %v336
        %v474 = vpop.f32.mrb[0].mxu0
        %v475 = vadd.f32 %v329, %v474
        %v476 = vpop.f32.mrb[0].mxu0
        %v477 = vpop.f32.mrb[0].mxu0
        %v478 = vadd.f32 %v329, %v477
        %v479 = vpop.f32.mrb[0].mxu0
        %480 = vmatprep.mubr.bf16.mxu0 0
        %481 = vmatmul.mubr.bf16.gmra.mrb[0].mxu0 %v339
        %v482 = vpop.f32.mrb[0].mxu0
        %v483 = vadd.f32 %v329, %v482
        %v484 = vpop.f32.mrb[0].mxu0
        %v485 = vpop.f32.mrb[0].mxu0
        %v486 = vadd.f32 %v329, %v485
        %v487 = vpop.f32.mrb[0].mxu0
        %488 = vmatprep.mubr.bf16.mxu0 0
        %489 = vmatmul.mubr.bf16.gmra.mrb[0].mxu0 %v342
        %v490 = vpop.f32.mrb[0].mxu0
        %v491 = vadd.f32 %v329, %v490
        %v492 = vpop.f32.mrb[0].mxu0
        %v493 = vpop.f32.mrb[0].mxu0
        %v494 = vadd.f32 %v329, %v493
        %v495 = vpop.f32.mrb[0].mxu0
        %496 = vmatprep.mubr.bf16.mxu0 0
        %497 = vmatmul.mubr.bf16.gmra.mrb[0].mxu0 %v345
        %v498 = vpop.f32.mrb[0].mxu0
        %v499 = vadd.f32 %v329, %v498
        %v500 = vpop.f32.mrb[0].mxu0
        %v501 = vpop.f32.mrb[0].mxu0
        %v502 = vadd.f32 %v329, %v501
        %v503 = vpop.f32.mrb[0].mxu0
        %504 = vmatprep.mubr.bf16.mxu0 0
        %505 = vmatmul.mubr.bf16.gmra.mrb[0].mxu0 %v348
        %v506 = vpop.f32.mrb[0].mxu0
        %v507 = vadd.f32 %v329, %v506
        %v508 = vpop.f32.mrb[0].mxu0
        %v509 = vpop.f32.mrb[0].mxu0
        %v510 = vadd.f32 %v329, %v509
        %v511 = vpop.f32.mrb[0].mxu0
        %512 = vmatprep.mubr.bf16.mxu0 0
        %513 = vmatmul.mubr.bf16.gmra.mrb[0].mxu0 %v351
        %v514 = vpop.f32.mrb[0].mxu0
        %v515 = vadd.f32 %v329, %v514
        %v516 = vpop.f32.mrb[0].mxu0
        %v517 = vpop.f32.mrb[0].mxu0
        %v518 = vadd.f32 %v329, %v517
        %v519 = vpop.f32.mrb[0].mxu0
        %520 = vmatprep.mubr.bf16.mxu0 0
        %521 = vmatmul.mubr.bf16.gmra.mrb[0].mxu0 %v354
        %v522 = vpop.f32.mrb[0].mxu0
        %v523 = vadd.f32 %v329, %v522
        %v524 = vpop.f32.mrb[0].mxu0
        %v525 = vpop.f32.mrb[0].mxu0
        %v526 = vadd.f32 %v329, %v525
        %v527 = vpop.f32.mrb[0].mxu0
        %528 = vmatprep.mubr.bf16.mxu0 0
        %529 = vmatmul.mubr.bf16.gmra.mrb[0].mxu0 %v357
        %v530 = vpop.f32.mrb[0].mxu0
        %v531 = vadd.f32 %v329, %v530
        %v532 = vpop.f32.mrb[0].mxu0
        %v533 = vpop.f32.mrb[0].mxu0
        %v534 = vadd.f32 %v329, %v533
        %v535 = vpop.f32.mrb[0].mxu0
        %536 = vmatprep.mubr.bf16.mxu0 0
        %537 = vmatmul.mubr.bf16.gmra.mrb[0].mxu0 %v360
        %v538 = vpop.f32.mrb[0].mxu0
        %v539 = vadd.f32 %v329, %v538
        %v540 = vpop.f32.mrb[0].mxu0
        %v541 = vpop.f32.mrb[0].mxu0
        %v542 = vadd.f32 %v329, %v541
        %v543 = vpop.f32.mrb[0].mxu0
        %544 = vmatprep.mubr.bf16.mxu0 0
        %545 = vmatmul.mubr.bf16.gmra.mrb[0].mxu0 %v363
        %v546 = vpop.f32.mrb[0].mxu0
        %v547 = vadd.f32 %v329, %v546
        %v548 = vpop.f32.mrb[0].mxu0
        %v549 = vpop.f32.mrb[0].mxu0
        %v550 = vadd.f32 %v329, %v549
        %v551 = vpop.f32.mrb[0].mxu0
        %552 = vmatprep.mubr.bf16.mxu0 0
        %553 = vmatmul.mubr.bf16.gmra.mrb[0].mxu0 %v366
        %v554 = vpop.f32.mrb[0].mxu0
        %v555 = vadd.f32 %v329, %v554
        %v556 = vpop.f32.mrb[0].mxu0
        %v557 = vpop.f32.mrb[0].mxu0
        %v558 = vadd.f32 %v329, %v557
        %v559 = vpop.f32.mrb[0].mxu0
        %560 = vmatprep.mubr.bf16.mxu0 0
        %561 = vmatmul.mubr.bf16.gmra.mrb[0].mxu0 %v369
        %v562 = vpop.f32.mrb[0].mxu0
        %v563 = vadd.f32 %v329, %v562
        %v564 = vpop.f32.mrb[0].mxu0
        %v565 = vpop.f32.mrb[0].mxu0
        %v566 = vadd.f32 %v329, %v565
        %v567 = vpop.f32.mrb[0].mxu0
        %568 = vmatprep.mubr.bf16.mxu0 0
        %569 = vmatmul.mubr.bf16.gmra.mrb[0].mxu0 %v372
        %v570 = vpop.f32.mrb[0].mxu0
        %v571 = vadd.f32 %v329, %v570
        %v572 = vpop.f32.mrb[0].mxu0
        %v573 = vpop.f32.mrb[0].mxu0
        %v574 = vadd.f32 %v329, %v573
        %v575 = vpop.f32.mrb[0].mxu0
        %576 = vmatprep.mubr.bf16.mxu0 0
        %577 = vmatmul.mubr.bf16.gmra.mrb[0].mxu0 %v375
        %v578 = vpop.f32.mrb[0].mxu0
        %v579 = vadd.f32 %v329, %v578
        %v580 = vpop.f32.mrb[0].mxu0
        %v581 = vpop.f32.mrb[0].mxu0
        %v582 = vadd.f32 %v329, %v581
        %v583 = vpop.f32.mrb[0].mxu0
        %584 = vmatprep.mubr.bf16.mxu0 0
        %585 = vmatmul.mubr.bf16.gmra.mrb[0].mxu0 %v378
        %v586 = vpop.f32.mrb[0].mxu0
        %v587 = vadd.f32 %v329, %v586
        %v588 = vpop.f32.mrb[0].mxu0
        %v589 = vpop.f32.mrb[0].mxu0
        %v590 = vadd.f32 %v329, %v589
        %v591 = vpop.f32.mrb[0].mxu0
        %592 = vmatprep.mubr.bf16.mxu0 0
        %593 = vmatmul.mubr.bf16.gmra.mrb[0].mxu0 %v381
        %v594 = vpop.f32.mrb[0].mxu0
        %v595 = vadd.f32 %v329, %v594
        %v596 = vpop.f32.mrb[0].mxu0
        %v597 = vpop.f32.mrb[0].mxu0
        %v598 = vadd.f32 %v329, %v597
        %v599 = vpop.f32.mrb[0].mxu0
        %600 = vmatprep.mubr.bf16.mxu0 0
        %601 = vmatmul.mubr.bf16.gmra.mrb[0].mxu0 %v384
        %v602 = vpop.f32.mrb[0].mxu0
        %v603 = vadd.f32 %v329, %v602
        %v604 = vpop.f32.mrb[0].mxu0
        %v605 = vpop.f32.mrb[0].mxu0
        %v606 = vadd.f32 %v329, %v605
        %v607 = vpop.f32.mrb[0].mxu0
        %608 = vmatprep.mubr.bf16.mxu0 0
        %609 = vmatmul.mubr.bf16.gmra.mrb[0].mxu0 %v387
        %v610 = vpop.f32.mrb[0].mxu0
        %v611 = vadd.f32 %v329, %v610
        %v612 = vpop.f32.mrb[0].mxu0
        %v613 = vpop.f32.mrb[0].mxu0
        %v614 = vadd.f32 %v329, %v613
        %v615 = vpop.f32.mrb[0].mxu0
        %616 = vmatprep.mubr.bf16.mxu0 0
        %617 = vmatmul.mubr.bf16.gmra.mrb[0].mxu0 %v390
        %v618 = vpop.f32.mrb[0].mxu0
        %v619 = vadd.f32 %v329, %v618
        %v620 = vpop.f32.mrb[0].mxu0
        %v621 = vpop.f32.mrb[0].mxu0
        %v622 = vadd.f32 %v329, %v621
        %v623 = vpop.f32.mrb[0].mxu0
        %624 = vmatprep.mubr.bf16.mxu0 0
        %625 = vmatmul.mubr.bf16.gmra.mrb[0].mxu0 %v393
        %v626 = vpop.f32.mrb[0].mxu0
        %v627 = vadd.f32 %v329, %v626
        %v628 = vpop.f32.mrb[0].mxu0
        %v629 = vpop.f32.mrb[0].mxu0
        %v630 = vadd.f32 %v329, %v629
        %v631 = vpop.f32.mrb[0].mxu0
        %632 = vmatprep.mubr.bf16.mxu0 0
        %633 = vmatmul.mubr.bf16.gmra.mrb[0].mxu0 %v396
        %v634 = vpop.f32.mrb[0].mxu0
        %v635 = vadd.f32 %v329, %v634
        %v636 = vpop.f32.mrb[0].mxu0
        %v637 = vpop.f32.mrb[0].mxu0
        %v638 = vadd.f32 %v329, %v637
        %v639 = vpop.f32.mrb[0].mxu0
        %640 = vmatprep.mubr.bf16.mxu0 0
        %641 = vmatmul.mubr.bf16.gmra.mrb[0].mxu0 %v399
        %v642 = vpop.f32.mrb[0].mxu0
        %v643 = vadd.f32 %v329, %v642
        %v644 = vpop.f32.mrb[0].mxu0
        %v645 = vpop.f32.mrb[0].mxu0
        %v646 = vadd.f32 %v329, %v645
        %v647 = vpop.f32.mrb[0].mxu0
        %648 = vmatprep.mubr.bf16.mxu0 0
        %649 = vmatmul.mubr.bf16.gmra.mrb[0].mxu0 %v402
        %v650 = vpop.f32.mrb[0].mxu0
        %v651 = vadd.f32 %v329, %v650
        %v652 = vpop.f32.mrb[0].mxu0
        %v653 = vpop.f32.mrb[0].mxu0
        %v654 = vadd.f32 %v329, %v653
        %v655 = vpop.f32.mrb[0].mxu0
        %656 = vmatprep.mubr.bf16.mxu0 0
        %657 = vmatmul.mubr.bf16.gmra.mrb[0].mxu0 %v405
        %v658 = vpop.f32.mrb[0].mxu0
        %v659 = vadd.f32 %v329, %v658
        %v660 = vpop.f32.mrb[0].mxu0
        %v661 = vpop.f32.mrb[0].mxu0
        %v662 = vadd.f32 %v329, %v661
        %v663 = vpop.f32.mrb[0].mxu0
        %664 = vmatprep.mubr.bf16.mxu0 0
        %665 = vmatmul.mubr.bf16.gmra.mrb[0].mxu0 %v408
        %v666 = vpop.f32.mrb[0].mxu0
        %v667 = vadd.f32 %v329, %v666
        %v668 = vpop.f32.mrb[0].mxu0
        %v669 = vpop.f32.mrb[0].mxu0
        %v670 = vadd.f32 %v329, %v669
        %v671 = vpop.f32.mrb[0].mxu0
        %672 = vmatprep.mubr.bf16.mxu0 0
        %673 = vmatmul.mubr.bf16.gmra.mrb[0].mxu0 %v411
        %v674 = vpop.f32.mrb[0].mxu0
        %v675 = vadd.f32 %v329, %v674
        %v676 = vpop.f32.mrb[0].mxu0
        %v677 = vpop.f32.mrb[0].mxu0
        %v678 = vadd.f32 %v329, %v677
        %v679 = vpop.f32.mrb[0].mxu0
        %680 = vmatprep.mubr.bf16.mxu0 0
        %681 = vmatmul.mubr.bf16.gmra.mrb[0].mxu0 %v414
        %v682 = vpop.f32.mrb[0].mxu0
        %v683 = vadd.f32 %v329, %v682
        %v684 = vpop.f32.mrb[0].mxu0
        %v685 = vpop.f32.mrb[0].mxu0
        %v686 = vadd.f32 %v329, %v685
        %v687 = vpop.f32.mrb[0].mxu0
        %688 = vmatprep.mubr.bf16.mxu0 0
        %689 = vmatmul.mubr.bf16.gmra.mrb[0].mxu0 %v417
        %v690 = vpop.f32.mrb[0].mxu0
        %v691 = vadd.f32 %v329, %v690
        %v692 = vpop.f32.mrb[0].mxu0
        %v693 = vpop.f32.mrb[0].mxu0
        %v694 = vadd.f32 %v329, %v693
        %v695 = vpop.f32.mrb[0].mxu0
        %696 = vmatprep.mubr.bf16.mxu0 0
        %697 = vmatmul.mubr.bf16.gmra.mrb[0].mxu0 %v420
        %v698 = vpop.f32.mrb[0].mxu0
        %v699 = vadd.f32 %v329, %v698
        %v700 = vpop.f32.mrb[0].mxu0
        %v701 = vpop.f32.mrb[0].mxu0
        %v702 = vadd.f32 %v329, %v701
        %v703 = vpop.f32.mrb[0].mxu0
        %704 = vmatprep.mubr.bf16.mxu0 0
        %705 = vmatmul.mubr.bf16.gmra.mrb[0].mxu0 %v423
        %v706 = vpop.f32.mrb[0].mxu0
        %v707 = vadd.f32 %v329, %v706
        %v708 = vpop.f32.mrb[0].mxu0
        %v709 = vpop.f32.mrb[0].mxu0
        %v710 = vadd.f32 %v329, %v709
        %v711 = vpop.f32.mrb[0].mxu0
        %712 = vmatprep.mubr.bf16.mxu0 0
        %713 = vmatmul.mubr.bf16.gmra.mrb[0].mxu0 %v426
        %v714 = vpop.f32.mrb[0].mxu0
        %v715 = vadd.f32 %v329, %v714
        %v716 = vpop.f32.mrb[0].mxu0
        %v717 = vpop.f32.mrb[0].mxu0
        %v718 = vadd.f32 %v329, %v717
        %v719 = vpop.f32.mrb[0].mxu0
        %720 = vdwg.mxu0
        %v721 = vtanh.pop %v467
        %v722 = vtanh.pop %v470
        %v723 = vtanh.pop %v475
        %v724 = vtanh.pop %v478
        %v725 = vtanh.pop %v483
        %v726 = vtanh.pop %v486
        %v727 = vtanh.pop %v491
        %v728 = vtanh.pop %v494
        %v729 = vtanh.pop %v499
        %v730 = vtanh.pop %v502
        %v731 = vtanh.pop %v507
        %v732 = vtanh.pop %v510
        %v733 = vtanh.pop %v515
        %v734 = vtanh.pop %v518
        %v735 = vtanh.pop %v523
        %v736 = vtanh.pop %v526
        %v737 = vtanh.pop %v531
        %v738 = vtanh.pop %v534
        %v739 = vtanh.pop %v539
        %v740 = vtanh.pop %v542
        %v741 = vtanh.pop %v547
        %v742 = vtanh.pop %v550
        %v743 = vtanh.pop %v555
        %v744 = vtanh.pop %v558
        %v745 = vtanh.pop %v563
        %v746 = vtanh.pop %v566
        %v747 = vtanh.pop %v571
        %v748 = vtanh.pop %v574
        %v749 = vtanh.pop %v579
        %v750 = vtanh.pop %v582
        %v751 = vtanh.pop %v587
        %v752 = vtanh.pop %v590
        %v753 = vtanh.pop %v595
        %v754 = vtanh.pop %v598
        %v755 = vtanh.pop %v603
        %v756 = vtanh.pop %v606
        %v757 = vtanh.pop %v611
        %v758 = vtanh.pop %v614
        %v759 = vtanh.pop %v619
        %v760 = vtanh.pop %v622
        %v761 = vtanh.pop %v627
        %v762 = vtanh.pop %v630
        %v763 = vtanh.pop %v635
        %v764 = vtanh.pop %v638
        %v765 = vtanh.pop %v643
        %v766 = vtanh.pop %v646
        %v767 = vtanh.pop %v651
        %v768 = vtanh.pop %v654
        %v769 = vtanh.pop %v659
        %v770 = vtanh.pop %v662
        %v771 = vtanh.pop %v667
        %v772 = vtanh.pop %v670
        %v773 = vtanh.pop %v675
        %v774 = vtanh.pop %v678
        %v775 = vtanh.pop %v683
        %v776 = vtanh.pop %v686
        %v777 = vtanh.pop %v691
        %v778 = vtanh.pop %v694
        %v779 = vtanh.pop %v699
        %v780 = vtanh.pop %v702
        %v781 = vtanh.pop %v707
        %v782 = vtanh.pop %v710
        %v783 = vtanh.pop %v715
        %v784 = vtanh.pop %v718
        %v785 = vpack.c.bf16 %v722, %v721
        %v786 = vpack.c.bf16 %v724, %v723
        %v787 = vpack.c.bf16 %v726, %v725
        %v788 = vpack.c.bf16 %v728, %v727
        %v789 = vpack.c.bf16 %v730, %v729
        %v790 = vpack.c.bf16 %v732, %v731
        %v791 = vpack.c.bf16 %v734, %v733
        %v792 = vpack.c.bf16 %v736, %v735
        %v793 = vpack.c.bf16 %v738, %v737
        %v794 = vpack.c.bf16 %v740, %v739
        %v795 = vpack.c.bf16 %v742, %v741
        %v796 = vpack.c.bf16 %v744, %v743
        %v797 = vpack.c.bf16 %v746, %v745
        %v798 = vpack.c.bf16 %v748, %v747
        %v799 = vpack.c.bf16 %v750, %v749
        %v800 = vpack.c.bf16 %v752, %v751
        %v801 = vpack.c.bf16 %v754, %v753
        %v802 = vpack.c.bf16 %v756, %v755
        %v803 = vpack.c.bf16 %v758, %v757
        %v804 = vpack.c.bf16 %v760, %v759
        %v805 = vpack.c.bf16 %v762, %v761
        %v806 = vpack.c.bf16 %v764, %v763
        %v807 = vpack.c.bf16 %v766, %v765
        %v808 = vpack.c.bf16 %v768, %v767
        %v809 = vpack.c.bf16 %v770, %v769
        %v810 = vpack.c.bf16 %v772, %v771
        %v811 = vpack.c.bf16 %v774, %v773
        %v812 = vpack.c.bf16 %v776, %v775
        %v813 = vpack.c.bf16 %v778, %v777
        %v814 = vpack.c.bf16 %v780, %v779
        %v815 = vpack.c.bf16 %v782, %v781
        %v816 = vpack.c.bf16 %v784, %v783
        %v817 = vld [vmem:[%s3] sm:$0xf]
        %v818 = vld [vmem:[%s3 + $0x4] sm:$0xf]
        %v819 = vld [vmem:[%s3 + $0x8] sm:$0xf]
        %v820 = vld [vmem:[%s3 + $0xc] sm:$0xf]
        %v821 = vld [vmem:[%s3 + $0x10] sm:$0xf]
        %v822 = vld [vmem:[%s3 + $0x14] sm:$0xf]
        %v823 = vld [vmem:[%s3 + $0x18] sm:$0xf]
        %v824 = vld [vmem:[%s3 + $0x1c] sm:$0xf]
        %v825 = vld [vmem:[%s3 + $0x20] sm:$0xf]
        %v826 = vld [vmem:[%s3 + $0x24] sm:$0xf]
        %v827 = vld [vmem:[%s3 + $0x28] sm:$0xf]
        %v828 = vld [vmem:[%s3 + $0x2c] sm:$0xf]
        %v829 = vld [vmem:[%s3 + $0x30] sm:$0xf]
        %v830 = vld [vmem:[%s3 + $0x34] sm:$0xf]
        %v831 = vld [vmem:[%s3 + $0x38] sm:$0xf]
        %v832 = vld [vmem:[%s3 + $0x3c] sm:$0xf]
        %v833 = vld [vmem:[%s4] sm:$0x1]
        %v835 = vlaneseq
        %v836 = vshrl.u32 %v835, 7
        %v837 = vsub.s32 0, %v836
        %v838 = vrot.slane %v833, %v837
        %v856 = vunpack.c.l.b16 %v817
        %v857 = vunpack.c.l.b16 %v818
        %v858 = vunpack.c.l.b16 %v819
        %v859 = vunpack.c.l.b16 %v820
        %v860 = vunpack.c.l.b16 %v821
        %v861 = vunpack.c.l.b16 %v822
        %v862 = vunpack.c.l.b16 %v823
        %v863 = vunpack.c.l.b16 %v824
        %v864 = vunpack.c.l.b16 %v825
        %v865 = vunpack.c.l.b16 %v826
        %v866 = vunpack.c.l.b16 %v827
        %v867 = vunpack.c.l.b16 %v828
        %v868 = vunpack.c.l.b16 %v829
        %v869 = vunpack.c.l.b16 %v830
        %v870 = vunpack.c.l.b16 %v831
        %v871 = vunpack.c.l.b16 %v832
        %v872 = vpack.c.b16 %v857, %v856
        %v873 = vpack.c.b16 %v859, %v858
        %v874 = vpack.c.b16 %v861, %v860
        %v875 = vpack.c.b16 %v863, %v862
        %v876 = vpack.c.b16 %v865, %v864
        %v877 = vpack.c.b16 %v867, %v866
        %v878 = vpack.c.b16 %v869, %v868
        %v879 = vpack.c.b16 %v871, %v870
        %888 = vmatprep.subr.bf16.mxu0 0
        %889 = vmatpush1.bf16.msra.mxu0 %v872
        %890 = vmatprep.subr.bf16.mxu0 0
        %891 = vmatpush1.bf16.msra.mxu0 %v873
        %892 = vmatprep.subr.bf16.mxu0 0
        %893 = vmatpush1.bf16.msra.mxu0 %v874
        %894 = vmatprep.subr.bf16.mxu0 0
        %895 = vmatpush1.bf16.msra.mxu0 %v875
        %896 = vmatprep.subr.bf16.mxu0 0
        %897 = vmatpush1.bf16.msra.mxu0 %v876
        %898 = vmatprep.subr.bf16.mxu0 0
        %899 = vmatpush1.bf16.msra.mxu0 %v877
        %900 = vmatprep.subr.bf16.mxu0 0
        %901 = vmatpush1.bf16.msra.mxu0 %v878
        %902 = vmatprep.subr.bf16.mxu0 0
        %903 = vmatpush1.bf16.msra.mxu0 %v879
        %904 = vmatprep.subr.bf16.mxu0 0
        %905 = vmatpush1.bf16.msra.mxu0 0
        %906 = vmatprep.subr.bf16.mxu0 0
        %907 = vmatpush1.bf16.msra.mxu0 0
        %908 = vmatprep.subr.bf16.mxu0 0
        %909 = vmatpush1.bf16.msra.mxu0 0
        %910 = vmatprep.subr.bf16.mxu0 0
        %911 = vmatpush1.bf16.msra.mxu0 0
        %912 = vmatprep.subr.bf16.mxu0 0
        %913 = vmatpush1.bf16.msra.mxu0 0
        %914 = vmatprep.subr.bf16.mxu0 0
        %915 = vmatpush1.bf16.msra.mxu0 0
        %916 = vmatprep.subr.bf16.mxu0 0
        %917 = vmatpush1.bf16.msra.mxu0 0
        %918 = vmatprep.subr.bf16.mxu0 0
        %919 = vmatpush1.bf16.msra.mxu0 0
        %920 = vmatprep.mubr.bf16.mxu0 0
        %921 = vmatmul.mubr.bf16.gmra.mrb[0].mxu0 %v785
        %v922 = vpop.f32.mrb[0].mxu0
        %v923 = vadd.f32 %v838, %v922
        %v924 = vpop.f32.mrb[0].mxu0
        %v925 = vpop.f32.mrb[0].mxu0
        %v926 = vadd.f32 %v838, %v925
        %v927 = vpop.f32.mrb[0].mxu0
        %928 = vmatprep.mubr.bf16.mxu0 0
        %929 = vmatmul.mubr.bf16.gmra.mrb[0].mxu0 %v786
        %v930 = vpop.f32.mrb[0].mxu0
        %v931 = vadd.f32 %v838, %v930
        %v932 = vpop.f32.mrb[0].mxu0
        %v933 = vpop.f32.mrb[0].mxu0
        %v934 = vadd.f32 %v838, %v933
        %v935 = vpop.f32.mrb[0].mxu0
        %936 = vmatprep.mubr.bf16.mxu0 0
        %937 = vmatmul.mubr.bf16.gmra.mrb[0].mxu0 %v787
        %v938 = vpop.f32.mrb[0].mxu0
        %v939 = vadd.f32 %v838, %v938
        %v940 = vpop.f32.mrb[0].mxu0
        %v941 = vpop.f32.mrb[0].mxu0
        %v942 = vadd.f32 %v838, %v941
        %v943 = vpop.f32.mrb[0].mxu0
        %944 = vmatprep.mubr.bf16.mxu0 0
        %945 = vmatmul.mubr.bf16.gmra.mrb[0].mxu0 %v788
        %v946 = vpop.f32.mrb[0].mxu0
        %v947 = vadd.f32 %v838, %v946
        %v948 = vpop.f32.mrb[0].mxu0
        %v949 = vpop.f32.mrb[0].mxu0
        %v950 = vadd.f32 %v838, %v949
        %v951 = vpop.f32.mrb[0].mxu0
        %952 = vmatprep.mubr.bf16.mxu0 0
        %953 = vmatmul.mubr.bf16.gmra.mrb[0].mxu0 %v789
        %v954 = vpop.f32.mrb[0].mxu0
        %v955 = vadd.f32 %v838, %v954
        %v956 = vpop.f32.mrb[0].mxu0
        %v957 = vpop.f32.mrb[0].mxu0
        %v958 = vadd.f32 %v838, %v957
        %v959 = vpop.f32.mrb[0].mxu0
        %960 = vmatprep.mubr.bf16.mxu0 0
        %961 = vmatmul.mubr.bf16.gmra.mrb[0].mxu0 %v790
        %v962 = vpop.f32.mrb[0].mxu0
        %v963 = vadd.f32 %v838, %v962
        %v964 = vpop.f32.mrb[0].mxu0
        %v965 = vpop.f32.mrb[0].mxu0
        %v966 = vadd.f32 %v838, %v965
        %v967 = vpop.f32.mrb[0].mxu0
        %968 = vmatprep.mubr.bf16.mxu0 0
        %969 = vmatmul.mubr.bf16.gmra.mrb[0].mxu0 %v791
        %v970 = vpop.f32.mrb[0].mxu0
        %v971 = vadd.f32 %v838, %v970
        %v972 = vpop.f32.mrb[0].mxu0
        %v973 = vpop.f32.mrb[0].mxu0
        %v974 = vadd.f32 %v838, %v973
        %v975 = vpop.f32.mrb[0].mxu0
        %976 = vmatprep.mubr.bf16.mxu0 0
        %977 = vmatmul.mubr.bf16.gmra.mrb[0].mxu0 %v792
        %v978 = vpop.f32.mrb[0].mxu0
        %v979 = vadd.f32 %v838, %v978
        %v980 = vpop.f32.mrb[0].mxu0
        %v981 = vpop.f32.mrb[0].mxu0
        %v982 = vadd.f32 %v838, %v981
        %v983 = vpop.f32.mrb[0].mxu0
        %984 = vmatprep.mubr.bf16.mxu0 0
        %985 = vmatmul.mubr.bf16.gmra.mrb[0].mxu0 %v793
        %v986 = vpop.f32.mrb[0].mxu0
        %v987 = vadd.f32 %v838, %v986
        %v988 = vpop.f32.mrb[0].mxu0
        %v989 = vpop.f32.mrb[0].mxu0
        %v990 = vadd.f32 %v838, %v989
        %v991 = vpop.f32.mrb[0].mxu0
        %992 = vmatprep.mubr.bf16.mxu0 0
        %993 = vmatmul.mubr.bf16.gmra.mrb[0].mxu0 %v794
        %v994 = vpop.f32.mrb[0].mxu0
        %v995 = vadd.f32 %v838, %v994
        %v996 = vpop.f32.mrb[0].mxu0
        %v997 = vpop.f32.mrb[0].mxu0
        %v998 = vadd.f32 %v838, %v997
        %v999 = vpop.f32.mrb[0].mxu0
        %1000 = vmatprep.mubr.bf16.mxu0 0
        %1001 = vmatmul.mubr.bf16.gmra.mrb[0].mxu0 %v795
        %v1002 = vpop.f32.mrb[0].mxu0
        %v1003 = vadd.f32 %v838, %v1002
        %v1004 = vpop.f32.mrb[0].mxu0
        %v1005 = vpop.f32.mrb[0].mxu0
        %v1006 = vadd.f32 %v838, %v1005
        %v1007 = vpop.f32.mrb[0].mxu0
        %1008 = vmatprep.mubr.bf16.mxu0 0
        %1009 = vmatmul.mubr.bf16.gmra.mrb[0].mxu0 %v796
        %v1010 = vpop.f32.mrb[0].mxu0
        %v1011 = vadd.f32 %v838, %v1010
        %v1012 = vpop.f32.mrb[0].mxu0
        %v1013 = vpop.f32.mrb[0].mxu0
        %v1014 = vadd.f32 %v838, %v1013
        %v1015 = vpop.f32.mrb[0].mxu0
        %1016 = vmatprep.mubr.bf16.mxu0 0
        %1017 = vmatmul.mubr.bf16.gmra.mrb[0].mxu0 %v797
        %v1018 = vpop.f32.mrb[0].mxu0
        %v1019 = vadd.f32 %v838, %v1018
        %v1020 = vpop.f32.mrb[0].mxu0
        %v1021 = vpop.f32.mrb[0].mxu0
        %v1022 = vadd.f32 %v838, %v1021
        %v1023 = vpop.f32.mrb[0].mxu0
        %1024 = vmatprep.mubr.bf16.mxu0 0
        %1025 = vmatmul.mubr.bf16.gmra.mrb[0].mxu0 %v798
        %v1026 = vpop.f32.mrb[0].mxu0
        %v1027 = vadd.f32 %v838, %v1026
        %v1028 = vpop.f32.mrb[0].mxu0
        %v1029 = vpop.f32.mrb[0].mxu0
        %v1030 = vadd.f32 %v838, %v1029
        %v1031 = vpop.f32.mrb[0].mxu0
        %1032 = vmatprep.mubr.bf16.mxu0 0
        %1033 = vmatmul.mubr.bf16.gmra.mrb[0].mxu0 %v799
        %v1034 = vpop.f32.mrb[0].mxu0
        %v1035 = vadd.f32 %v838, %v1034
        %v1036 = vpop.f32.mrb[0].mxu0
        %v1037 = vpop.f32.mrb[0].mxu0
        %v1038 = vadd.f32 %v838, %v1037
        %v1039 = vpop.f32.mrb[0].mxu0
        %1040 = vmatprep.mubr.bf16.mxu0 0
        %1041 = vmatmul.mubr.bf16.gmra.mrb[0].mxu0 %v800
        %v1042 = vpop.f32.mrb[0].mxu0
        %v1043 = vadd.f32 %v838, %v1042
        %v1044 = vpop.f32.mrb[0].mxu0
        %v1045 = vpop.f32.mrb[0].mxu0
        %v1046 = vadd.f32 %v838, %v1045
        %v1047 = vpop.f32.mrb[0].mxu0
        %1048 = vmatprep.mubr.bf16.mxu0 0
        %1049 = vmatmul.mubr.bf16.gmra.mrb[0].mxu0 %v801
        %v1050 = vpop.f32.mrb[0].mxu0
        %v1051 = vadd.f32 %v838, %v1050
        %v1052 = vpop.f32.mrb[0].mxu0
        %v1053 = vpop.f32.mrb[0].mxu0
        %v1054 = vadd.f32 %v838, %v1053
        %v1055 = vpop.f32.mrb[0].mxu0
        %1056 = vmatprep.mubr.bf16.mxu0 0
        %1057 = vmatmul.mubr.bf16.gmra.mrb[0].mxu0 %v802
        %v1058 = vpop.f32.mrb[0].mxu0
        %v1059 = vadd.f32 %v838, %v1058
        %v1060 = vpop.f32.mrb[0].mxu0
        %v1061 = vpop.f32.mrb[0].mxu0
        %v1062 = vadd.f32 %v838, %v1061
        %v1063 = vpop.f32.mrb[0].mxu0
        %1064 = vmatprep.mubr.bf16.mxu0 0
        %1065 = vmatmul.mubr.bf16.gmra.mrb[0].mxu0 %v803
        %v1066 = vpop.f32.mrb[0].mxu0
        %v1067 = vadd.f32 %v838, %v1066
        %v1068 = vpop.f32.mrb[0].mxu0
        %v1069 = vpop.f32.mrb[0].mxu0
        %v1070 = vadd.f32 %v838, %v1069
        %v1071 = vpop.f32.mrb[0].mxu0
        %1072 = vmatprep.mubr.bf16.mxu0 0
        %1073 = vmatmul.mubr.bf16.gmra.mrb[0].mxu0 %v804
        %v1074 = vpop.f32.mrb[0].mxu0
        %v1075 = vadd.f32 %v838, %v1074
        %v1076 = vpop.f32.mrb[0].mxu0
        %v1077 = vpop.f32.mrb[0].mxu0
        %v1078 = vadd.f32 %v838, %v1077
        %v1079 = vpop.f32.mrb[0].mxu0
        %1080 = vmatprep.mubr.bf16.mxu0 0
        %1081 = vmatmul.mubr.bf16.gmra.mrb[0].mxu0 %v805
        %v1082 = vpop.f32.mrb[0].mxu0
        %v1083 = vadd.f32 %v838, %v1082
        %v1084 = vpop.f32.mrb[0].mxu0
        %v1085 = vpop.f32.mrb[0].mxu0
        %v1086 = vadd.f32 %v838, %v1085
        %v1087 = vpop.f32.mrb[0].mxu0
        %1088 = vmatprep.mubr.bf16.mxu0 0
        %1089 = vmatmul.mubr.bf16.gmra.mrb[0].mxu0 %v806
        %v1090 = vpop.f32.mrb[0].mxu0
        %v1091 = vadd.f32 %v838, %v1090
        %v1092 = vpop.f32.mrb[0].mxu0
        %v1093 = vpop.f32.mrb[0].mxu0
        %v1094 = vadd.f32 %v838, %v1093
        %v1095 = vpop.f32.mrb[0].mxu0
        %1096 = vmatprep.mubr.bf16.mxu0 0
        %1097 = vmatmul.mubr.bf16.gmra.mrb[0].mxu0 %v807
        %v1098 = vpop.f32.mrb[0].mxu0
        %v1099 = vadd.f32 %v838, %v1098
        %v1100 = vpop.f32.mrb[0].mxu0
        %v1101 = vpop.f32.mrb[0].mxu0
        %v1102 = vadd.f32 %v838, %v1101
        %v1103 = vpop.f32.mrb[0].mxu0
        %1104 = vmatprep.mubr.bf16.mxu0 0
        %1105 = vmatmul.mubr.bf16.gmra.mrb[0].mxu0 %v808
        %v1106 = vpop.f32.mrb[0].mxu0
        %v1107 = vadd.f32 %v838, %v1106
        %v1108 = vpop.f32.mrb[0].mxu0
        %v1109 = vpop.f32.mrb[0].mxu0
        %v1110 = vadd.f32 %v838, %v1109
        %v1111 = vpop.f32.mrb[0].mxu0
        %1112 = vmatprep.mubr.bf16.mxu0 0
        %1113 = vmatmul.mubr.bf16.gmra.mrb[0].mxu0 %v809
        %v1114 = vpop.f32.mrb[0].mxu0
        %v1115 = vadd.f32 %v838, %v1114
        %v1116 = vpop.f32.mrb[0].mxu0
        %v1117 = vpop.f32.mrb[0].mxu0
        %v1118 = vadd.f32 %v838, %v1117
        %v1119 = vpop.f32.mrb[0].mxu0
        %1120 = vmatprep.mubr.bf16.mxu0 0
        %1121 = vmatmul.mubr.bf16.gmra.mrb[0].mxu0 %v810
        %v1122 = vpop.f32.mrb[0].mxu0
        %v1123 = vadd.f32 %v838, %v1122
        %v1124 = vpop.f32.mrb[0].mxu0
        %v1125 = vpop.f32.mrb[0].mxu0
        %v1126 = vadd.f32 %v838, %v1125
        %v1127 = vpop.f32.mrb[0].mxu0
        %1128 = vmatprep.mubr.bf16.mxu0 0
        %1129 = vmatmul.mubr.bf16.gmra.mrb[0].mxu0 %v811
        %v1130 = vpop.f32.mrb[0].mxu0
        %v1131 = vadd.f32 %v838, %v1130
        %v1132 = vpop.f32.mrb[0].mxu0
        %v1133 = vpop.f32.mrb[0].mxu0
        %v1134 = vadd.f32 %v838, %v1133
        %v1135 = vpop.f32.mrb[0].mxu0
        %1136 = vmatprep.mubr.bf16.mxu0 0
        %1137 = vmatmul.mubr.bf16.gmra.mrb[0].mxu0 %v812
        %v1138 = vpop.f32.mrb[0].mxu0
        %v1139 = vadd.f32 %v838, %v1138
        %v1140 = vpop.f32.mrb[0].mxu0
        %v1141 = vpop.f32.mrb[0].mxu0
        %v1142 = vadd.f32 %v838, %v1141
        %v1143 = vpop.f32.mrb[0].mxu0
        %1144 = vmatprep.mubr.bf16.mxu0 0
        %1145 = vmatmul.mubr.bf16.gmra.mrb[0].mxu0 %v813
        %v1146 = vpop.f32.mrb[0].mxu0
        %v1147 = vadd.f32 %v838, %v1146
        %v1148 = vpop.f32.mrb[0].mxu0
        %v1149 = vpop.f32.mrb[0].mxu0
        %v1150 = vadd.f32 %v838, %v1149
        %v1151 = vpop.f32.mrb[0].mxu0
        %1152 = vmatprep.mubr.bf16.mxu0 0
        %1153 = vmatmul.mubr.bf16.gmra.mrb[0].mxu0 %v814
        %v1154 = vpop.f32.mrb[0].mxu0
        %v1155 = vadd.f32 %v838, %v1154
        %v1156 = vpop.f32.mrb[0].mxu0
        %v1157 = vpop.f32.mrb[0].mxu0
        %v1158 = vadd.f32 %v838, %v1157
        %v1159 = vpop.f32.mrb[0].mxu0
        %1160 = vmatprep.mubr.bf16.mxu0 0
        %1161 = vmatmul.mubr.bf16.gmra.mrb[0].mxu0 %v815
        %v1162 = vpop.f32.mrb[0].mxu0
        %v1163 = vadd.f32 %v838, %v1162
        %v1164 = vpop.f32.mrb[0].mxu0
        %v1165 = vpop.f32.mrb[0].mxu0
        %v1166 = vadd.f32 %v838, %v1165
        %v1167 = vpop.f32.mrb[0].mxu0
        %1168 = vmatprep.mubr.bf16.mxu0 0
        %1169 = vmatmul.mubr.bf16.gmra.mrb[0].mxu0 %v816
        %v1170 = vpop.f32.mrb[0].mxu0
        %v1171 = vadd.f32 %v838, %v1170
        %v1172 = vpop.f32.mrb[0].mxu0
        %v1173 = vpop.f32.mrb[0].mxu0
        %v1174 = vadd.f32 %v838, %v1173
        %v1175 = vpop.f32.mrb[0].mxu0
        %1176 = vdwg.mxu0
        %1177 = vst [vmem:[%s218] sm:$0xff] %v923
        %1178 = vst [vmem:[%s218 + $0x8] sm:$0xff] %v926
        %1179 = vst [vmem:[%s218 + $0x10] sm:$0xff] %v931
        %1180 = vst [vmem:[%s218 + $0x18] sm:$0xff] %v934
        %1181 = vst [vmem:[%s218 + $0x20] sm:$0xff] %v939
        %1182 = vst [vmem:[%s218 + $0x28] sm:$0xff] %v942
        %1183 = vst [vmem:[%s218 + $0x30] sm:$0xff] %v947
        %1184 = vst [vmem:[%s218 + $0x38] sm:$0xff] %v950
        %1185 = vst [vmem:[%s218 + $0x40] sm:$0xff] %v955
        %1186 = vst [vmem:[%s218 + $0x48] sm:$0xff] %v958
        %1187 = vst [vmem:[%s218 + $0x50] sm:$0xff] %v963
        %1188 = vst [vmem:[%s218 + $0x58] sm:$0xff] %v966
        %1189 = vst [vmem:[%s218 + $0x60] sm:$0xff] %v971
        %1190 = vst [vmem:[%s218 + $0x68] sm:$0xff] %v974
        %1191 = vst [vmem:[%s218 + $0x70] sm:$0xff] %v979
        %1192 = vst [vmem:[%s218 + $0x78] sm:$0xff] %v982
        %1193 = vst [vmem:[%s218 + $0x80] sm:$0xff] %v987
        %1194 = vst [vmem:[%s218 + $0x88] sm:$0xff] %v990
        %1195 = vst [vmem:[%s218 + $0x90] sm:$0xff] %v995
        %1196 = vst [vmem:[%s218 + $0x98] sm:$0xff] %v998
        %1197 = vst [vmem:[%s218 + $0xa0] sm:$0xff] %v1003
        %1198 = vst [vmem:[%s218 + $0xa8] sm:$0xff] %v1006
        %1199 = vst [vmem:[%s218 + $0xb0] sm:$0xff] %v1011
        %1200 = vst [vmem:[%s218 + $0xb8] sm:$0xff] %v1014
        %1201 = vst [vmem:[%s218 + $0xc0] sm:$0xff] %v1019
        %1202 = vst [vmem:[%s218 + $0xc8] sm:$0xff] %v1022
        %1203 = vst [vmem:[%s218 + $0xd0] sm:$0xff] %v1027
        %1204 = vst [vmem:[%s218 + $0xd8] sm:$0xff] %v1030
        %1205 = vst [vmem:[%s218 + $0xe0] sm:$0xff] %v1035
        %1206 = vst [vmem:[%s218 + $0xe8] sm:$0xff] %v1038
        %1207 = vst [vmem:[%s218 + $0xf0] sm:$0xff] %v1043
        %1208 = vst [vmem:[%s218 + $0xf8] sm:$0xff] %v1046
        %1209 = vst [vmem:[%s218 + $0x100] sm:$0xff] %v1051
        %1210 = vst [vmem:[%s218 + $0x108] sm:$0xff] %v1054
        %1211 = vst [vmem:[%s218 + $0x110] sm:$0xff] %v1059
        %1212 = vst [vmem:[%s218 + $0x118] sm:$0xff] %v1062
        %1213 = vst [vmem:[%s218 + $0x120] sm:$0xff] %v1067
        %1214 = vst [vmem:[%s218 + $0x128] sm:$0xff] %v1070
        %1215 = vst [vmem:[%s218 + $0x130] sm:$0xff] %v1075
        %1216 = vst [vmem:[%s218 + $0x138] sm:$0xff] %v1078
        %1217 = vst [vmem:[%s218 + $0x140] sm:$0xff] %v1083
        %1218 = vst [vmem:[%s218 + $0x148] sm:$0xff] %v1086
        %1219 = vst [vmem:[%s218 + $0x150] sm:$0xff] %v1091
        %1220 = vst [vmem:[%s218 + $0x158] sm:$0xff] %v1094
        %1221 = vst [vmem:[%s218 + $0x160] sm:$0xff] %v1099
        %1222 = vst [vmem:[%s218 + $0x168] sm:$0xff] %v1102
        %1223 = vst [vmem:[%s218 + $0x170] sm:$0xff] %v1107
        %1224 = vst [vmem:[%s218 + $0x178] sm:$0xff] %v1110
        %1225 = vst [vmem:[%s218 + $0x180] sm:$0xff] %v1115
        %1226 = vst [vmem:[%s218 + $0x188] sm:$0xff] %v1118
        %1227 = vst [vmem:[%s218 + $0x190] sm:$0xff] %v1123
        %1228 = vst [vmem:[%s218 + $0x198] sm:$0xff] %v1126
        %1229 = vst [vmem:[%s218 + $0x1a0] sm:$0xff] %v1131
        %1230 = vst [vmem:[%s218 + $0x1a8] sm:$0xff] %v1134
        %1231 = vst [vmem:[%s218 + $0x1b0] sm:$0xff] %v1139
        %1232 = vst [vmem:[%s218 + $0x1b8] sm:$0xff] %v1142
        %1233 = vst [vmem:[%s218 + $0x1c0] sm:$0xff] %v1147
        %1234 = vst [vmem:[%s218 + $0x1c8] sm:$0xff] %v1150
        %1235 = vst [vmem:[%s218 + $0x1d0] sm:$0xff] %v1155
        %1236 = vst [vmem:[%s218 + $0x1d8] sm:$0xff] %v1158
        %1237 = vst [vmem:[%s218 + $0x1e0] sm:$0xff] %v1163
        %1238 = vst [vmem:[%s218 + $0x1e8] sm:$0xff] %v1166
        %1239 = vst [vmem:[%s218 + $0x1f0] sm:$0xff] %v1171
        %1240 = vst [vmem:[%s218 + $0x1f8] sm:$0xff] %v1174
        %s1241 = sand.u32 %s137, 1
        %s1242 = scalar_lea.sflag [#allocation3], %s1241
        %s1243 = sand.u32 %s137, 1
        %s1244 = smul.addr %s1243, 512
        %s1245 = scalar_lea.vmem [#allocation2], %s1244
        // Predicated region
        $region41: #{tpu_custom_call.1} parent=39 // pred_check
          %p1246 = pneg %p147
        $region42: #{tpu_custom_call.1} parent=39 // pred_check_branch
          %1248 = sbr.rel (%p1246) target = $region44
        $region43: #{tpu_custom_call.1} parent=39 // pred_region
          %s1249 = smul.u32 64, %s19
          %s1251 = ssub.s32 8192, 8192
          %1252 = vsyncadd %s1242, %s1251
          %s1253 = smul.addr %s1249, 128
          %s1254 = scalar_lea.hbm %s5, %s1253
          %s1255 = sshll.u32 %s1245, 4
          %s1256 = int_to_ptr.vmem [resolvable:$true] %s1255
          %1261 = dma.vmem_to_hbm [thread:$0]  %s1256, 8192, %s1254, %s1242, 128, 128, 8
        $region44: #{tpu_custom_call.1} parent=39 // pred_fallthru
          _
      $region40: #{tpu_custom_call.1} parent=5 // pred_fallthru
        _
      %p1262 = scmp.le.s32.totalorder 2, %s14
      // Predicated region
      $region45: #{tpu_custom_call.1} parent=5 // pred_check
        %p1263 = pneg %p1262
      $region46: #{tpu_custom_call.1} parent=5 // pred_check_branch
        %1265 = sbr.rel (%p1263) target = $region48
      $region47: #{tpu_custom_call.1} parent=5 // pred_region
        %s1266 = ssub.s32 %s14, 2
        // Predicated region
        $region49: #{tpu_custom_call.1} parent=47 // pred_check
          %p1267 = pneg %p153
        $region50: #{tpu_custom_call.1} parent=47 // pred_check_branch
          %1269 = sbr.rel (%p1267) target = $region52
        $region51: #{tpu_custom_call.1} parent=47 // pred_region
          %s1270 = sand.u32 %s138, 1
          %s1271 = scalar_lea.sflag [#allocation3], %s1270
          %s1272 = sand.u32 %s138, 1
          %s1273 = smul.addr %s1272, 512
          %s1274 = scalar_lea.vmem [#allocation2], %s1273
          %1275 = dma.done %s1271, 8192
        $region52: #{tpu_custom_call.1} parent=47 // pred_fallthru
          _
      $region48: #{tpu_custom_call.1} parent=5 // pred_fallthru
        _
    $region6: #{tpu_custom_call.1} parent=1 // loop_footer
      %s18 = sadd.s32 1, %s14
    $region7: #{tpu_custom_call.1} parent=1 // loop_footer_branch
      %13 = sbr.rel target = $region3
    $region8: #{tpu_custom_call.1} parent=1 // loop_exit
      _
    %1276 = vsyncpa [#allocation3], 1
    %s1277 = scalar_lea.sflag [#allocation3], 1
    %1278 = vsyncpa %s1277, 1

</llo_original>
